<compile_context>
chip_gen: v7x
topology: tpu7x:2x2x1
jax: 0.10.0
libtpu: 0.0.40
codegen_flags: <defaults>
</compile_context>

<pallas_src>
import jax
import jax.numpy as jnp
from jax import lax
from jax.experimental import pallas as pl
from jax.experimental.pallas import tpu as pltpu

CIN = 6
COUT = 6
K = 3
STRIDE = 1
PAD = 1
OUT_PAD = 1
PAD_LO = K - 1 - PAD               # 1
PAD_HI = K - 1 - PAD + OUT_PAD     # 2


def convt_tanh_kernel(cols_ref, w_ref, b_ref, o_ref):
    # cols_ref: (1, K*K*Cin, Hout*Wout)  im2col slab for one image (spatial in lanes)
    # w_ref   : (Cout, K*K*Cin)          flipped / channel-swapped weights
    # b_ref   : (Cout, 1)
    # o_ref   : (1, Cout, Hout*Wout)
    out = jnp.dot(w_ref[...], cols_ref[0],
                  preferred_element_type=jnp.float32)   # single MXU matmul (6,54)@(54,64)
    out = jnp.tanh(out + b_ref[...])                    # bias + tanh fused (EUP)
    o_ref[...] = out[None].astype(o_ref.dtype)          # lane-dense (64-wide) store


def conv_transpose_tanh(x_nchw, weight_t, bias):
    """x_nchw: (N, Cin, H, W) f32; weight_t: (Cin, Cout, K, K) (torch layout);
       bias: (Cout,).  Returns (N, Cout, H+1, W+1) f32, NCHW."""
    n, cin, h, w = x_nchw.shape
    hout = (h - 1) * STRIDE - 2 * PAD + K + OUT_PAD
    wout = (w - 1) * STRIDE - 2 * PAD + K + OUT_PAD
    hw = hout * wout
    kkc = K * K * cin

    # im2col in plain JAX (stays channel-major / NCHW; XLA fuses pad + gather).
    xp = jnp.pad(x_nchw, ((0, 0), (0, 0), (PAD_LO, PAD_HI), (PAD_LO, PAD_HI)))
    patches = jnp.stack(
        [xp[:, :, kh:kh + hout, kw:kw + wout] for kh in range(K) for kw in range(K)],
        axis=1)                                   # (N, K*K, Cin, Hout, Wout)
    cols = patches.reshape(n, kkc, hw)            # (N, 54, 64)  free row-major reshape

    # equivalent regular-conv weight as a (Cout, K*K*Cin) matmul operand:
    # W2[co, (kh*K+kw)*Cin + ci] = weight_t[ci, co, K-1-kh, K-1-kw]
    w2 = jnp.transpose(weight_t[:, :, ::-1, ::-1], (1, 2, 3, 0)).reshape(COUT, kkc)
    b2 = bias.reshape(COUT, 1)

    out_flat = pl.pallas_call(
        convt_tanh_kernel,
        out_shape=jax.ShapeDtypeStruct((n, COUT, hw), jnp.float32),
        grid=(n,),
        in_specs=[
            pl.BlockSpec((1, kkc, hw), lambda i: (i, 0, 0)),
            pl.BlockSpec((COUT, kkc), lambda i: (0, 0)),
            pl.BlockSpec((COUT, 1), lambda i: (0, 0)),
        ],
        out_specs=pl.BlockSpec((1, COUT, hw), lambda i: (i, 0, 0)),
        compiler_params=pltpu.CompilerParams(
            dimension_semantics=("parallel",)),
    )(cols, w2, b2)

    # free bitcast back to (N, Cout, Hout, Wout); result is already NCHW.
    return out_flat.reshape(n, COUT, hout, wout)


conv_transpose_tanh_jit = jax.jit(conv_transpose_tanh)


if __name__ == "__main__":
    key = jax.random.PRNGKey(0)
    kx, kw, kb = jax.random.split(key, 3)

    # module-implied shapes: x1 = randn(1, 6, 7, 7)
    x = jax.random.normal(kx, (1, CIN, 7, 7), dtype=jnp.float32)

    # deterministic param init (PyTorch-style uniform bound = 1/sqrt(Cin*K*K))
    bound = 1.0 / (CIN * K * K) ** 0.5
    weight = jax.random.uniform(kw, (CIN, COUT, K, K), jnp.float32, -bound, bound)
    bias = jax.random.uniform(kb, (COUT,), jnp.float32, -bound, bound)

    out = jax.block_until_ready(conv_transpose_tanh_jit(x, weight, bias))
    assert out.shape == (1, COUT, 8, 8), out.shape

    # reference: VALID conv (NCHW/OIHW) on the same padded input, then tanh
    xp_ref = jnp.pad(x, ((0, 0), (0, 0), (PAD_LO, PAD_HI), (PAD_LO, PAD_HI)))
    w_oihw = jnp.transpose(weight[:, :, ::-1, ::-1], (1, 0, 2, 3))
    ref = lax.conv_general_dilated(
        xp_ref, w_oihw, window_strides=(1, 1), padding="VALID",
        dimension_numbers=("NCHW", "OIHW", "NCHW"),
        precision=lax.Precision.HIGHEST)
    ref = jnp.tanh(ref + bias.reshape(1, COUT, 1, 1))
    assert jnp.allclose(out, ref, atol=2e-5, rtol=1e-5), \
        float(jnp.max(jnp.abs(out - ref)))

    print("KERNEL_OK")
</pallas_src>

<mosaic_0001>
module attributes {stable_mosaic.version = 11 : i64} {
  func.func @convt_tanh_kernel(%arg0: i32, %arg1: memref<1x54x64xf32, #tpu.memory_space<vmem>>, %arg2: memref<6x54xf32, #tpu.memory_space<vmem>>, %arg3: memref<6x1xf32, #tpu.memory_space<vmem>>, %arg4: memref<1x6x64xf32, #tpu.memory_space<vmem>>) attributes {dimension_semantics = [#tpu.dimension_semantics<parallel>], iteration_bounds = array<i64: 1>, scalar_prefetch = 0 : i64, scratch_operands = 0 : i64, tpu.core_type = #tpu.core_type<tc>, window_params = [{transform_indices = @transform_0, window_bounds = array<i64: 1, 54, 64>}, {pipeline_mode = #tpu.pipeline_mode<synchronous>, transform_indices = @transform_1, window_bounds = array<i64: 6, 54>}, {pipeline_mode = #tpu.pipeline_mode<synchronous>, transform_indices = @transform_2, window_bounds = array<i64: 6, 1>}, {transform_indices = @transform_3, window_bounds = array<i64: 1, 6, 64>}]} {
    %c0 = arith.constant 0 : index
    %c0_0 = arith.constant 0 : index
    %0 = vector.load %arg2[%c0, %c0_0] : memref<6x54xf32, #tpu.memory_space<vmem>>, vector<6x54xf32>
    %c0_1 = arith.constant 0 : index
    %c0_2 = arith.constant 0 : index
    %c0_3 = arith.constant 0 : index
    %1 = vector.load %arg1[%c0_1, %c0_2, %c0_3] : memref<1x54x64xf32, #tpu.memory_space<vmem>>, vector<1x54x64xf32>
    %2 = vector.shape_cast %1 : vector<1x54x64xf32> to vector<54x64xf32>
    %cst = arith.constant dense<0.000000e+00> : vector<6x64xf32>
    %3 = tpu.matmul %0, %2, %cst {dimension_numbers = #tpu.dot_dimension_numbers<[1], [0], [0], [1], [0, 0, 1, 1], [], []>} : vector<6x54xf32>, vector<54x64xf32>, vector<6x64xf32> -> vector<6x64xf32>
    %c0_4 = arith.constant 0 : index
    %c0_5 = arith.constant 0 : index
    %4 = vector.load %arg3[%c0_4, %c0_5] : memref<6x1xf32, #tpu.memory_space<vmem>>, vector<6x1xf32>
    %5 = vector.broadcast %4 : vector<6x1xf32> to vector<6x64xf32>
    %6 = arith.addf %3, %5 : vector<6x64xf32>
    %7 = math.tanh %6 : vector<6x64xf32>
    %8 = vector.shape_cast %7 : vector<6x64xf32> to vector<1x6x64xf32>
    %c0_6 = arith.constant 0 : index
    %c0_7 = arith.constant 0 : index
    %c0_8 = arith.constant 0 : index
    %9 = vector.load %arg4[%c0_6, %c0_7, %c0_8] : memref<1x6x64xf32, #tpu.memory_space<vmem>>, vector<1x6x64xf32>
    tpu.vector_store %arg4[%c0_6, %c0_7, %c0_8], %8 {strides = array<i32>} : memref<1x6x64xf32, #tpu.memory_space<vmem>>, vector<1x6x64xf32>,
    return
  }
  func.func @transform_0(%arg0: i32) -> (i32, i32, i32) {
    %c0_i32 = arith.constant 0 : i32
    %c0_i32_0 = arith.constant 0 : i32
    %c0_i32_1 = arith.constant 0 : i32
    return %arg0, %c0_i32, %c0_i32_0 : i32, i32, i32
  }
  func.func @transform_1(%arg0: i32) -> (i32, i32) {
    %c0_i32 = arith.constant 0 : i32
    %c0_i32_0 = arith.constant 0 : i32
    %c0_i32_1 = arith.constant 0 : i32
    return %c0_i32, %c0_i32_0 : i32, i32
  }
  func.func @transform_2(%arg0: i32) -> (i32, i32) {
    %c0_i32 = arith.constant 0 : i32
    %c0_i32_0 = arith.constant 0 : i32
    %c0_i32_1 = arith.constant 0 : i32
    return %c0_i32, %c0_i32_0 : i32, i32
  }
  func.func @transform_3(%arg0: i32) -> (i32, i32, i32) {
    %c0_i32 = arith.constant 0 : i32
    %c0_i32_0 = arith.constant 0 : i32
    %c0_i32_1 = arith.constant 0 : i32
    return %arg0, %c0_i32, %c0_i32_0 : i32, i32, i32
  }
}

</mosaic_0001>

<llo_original>
// kernel: conv_transpose_tanh.1
$region0: #{conv_transpose_tanh.1}
  #allocation0 [shape = 'u32[]', space=smem, size = 0x4, offset = 0x4, fixed_abs, tag = 'smem constant byte address 0x4 - core index']
  #allocation1 [shape = 'u32[144,128]{1,0:T(1,128)}', space=vmem, size = 0x12000, scoped, tag = 'internal scratch']
  %s0 = inlined_call_operand.vmem [shape: f32[1,54,64], index: 0, kind: input, shape index: {}]
  %s1 = inlined_call_operand.vmem [shape: f32[6,54], index: 1, kind: input, shape index: {}]
  %s2 = inlined_call_operand.vmem [shape: f32[6,1], index: 2, kind: input, shape index: {}]
  %s3 = inlined_call_operand.vmem [shape: f32[1,6,64], index: 3, kind: output, shape index: {}]
  %s4 = sld [smem:[#allocation0]]
  $region22: #{conv_transpose_tanh.1} parent=0
    _
  %s6 = ssub.s32 1, %s4
  %s7 = scalar_select 0, %s6, %s4
  // Predicated region
  $region2: #{conv_transpose_tanh.1} parent=0 // pred_check
    _
  $region3: #{conv_transpose_tanh.1} parent=0 // pred_check_branch
    %9 = sbr.rel (0) target = $region5
  $region4: #{conv_transpose_tanh.1} parent=0 // pred_region
    _
  $region5: #{conv_transpose_tanh.1} parent=0 // pred_fallthru
    _
  // Predicated region
  $region6: #{conv_transpose_tanh.1} parent=0 // pred_check
    _
  $region7: #{conv_transpose_tanh.1} parent=0 // pred_check_branch
    %11 = sbr.rel (0) target = $region9
  $region8: #{conv_transpose_tanh.1} parent=0 // pred_region
    _
  $region9: #{conv_transpose_tanh.1} parent=0 // pred_fallthru
    _
  // Predicated region
  $region10: #{conv_transpose_tanh.1} parent=0 // pred_check
    _
  $region11: #{conv_transpose_tanh.1} parent=0 // pred_check_branch
    %13 = sbr.rel (0) target = $region13
  $region12: #{conv_transpose_tanh.1} parent=0 // pred_region
    _
  $region13: #{conv_transpose_tanh.1} parent=0 // pred_fallthru
    _
  %v14 = vld [vmem:[%s1] sm:$0x3f]
  %v15 = vld [vmem:[%s0] sm:$0xff]
  %v16 = vld [vmem:[%s0 + $0x8] sm:$0xff]
  %v17 = vld [vmem:[%s0 + $0x10] sm:$0xff]
  %v18 = vld [vmem:[%s0 + $0x18] sm:$0xff]
  %v19 = vld [vmem:[%s0 + $0x20] sm:$0xff]
  %v20 = vld [vmem:[%s0 + $0x28] sm:$0xff]
  %v21 = vld [vmem:[%s0 + $0x30] sm:$0x3f]
  %v22 = vld [vmem:[%s2] sm:$0x3f]
  %24 = vset.pattern.permute.xlu0 0
  %25 = vperm.xlu0 %24, %v22
  %v26 = vpop.permute.xlu0 %25
  %vm28 = vcmask 441344
  %v30 = vsel %vm28, %v14, 0
  %vm32 = vcmask 1045504
  %v34 = vsel %vm32, %v21, 0
  %36 = vmatprep.subr.mxu0 0.0
  %37 = vmatpush1.msra.mxu0 %v15
  %38 = vmatprep.subr.mxu0 0.0
  %39 = vmatpush1.msra.mxu0 %v16
  %40 = vmatprep.subr.mxu0 0.0
  %41 = vmatpush1.msra.mxu0 %v17
  %42 = vmatprep.subr.mxu0 0.0
  %43 = vmatpush1.msra.mxu0 %v18
  %44 = vmatprep.subr.mxu0 0.0
  %45 = vmatpush1.msra.mxu0 %v19
  %46 = vmatprep.subr.mxu0 0.0
  %47 = vmatpush1.msra.mxu0 %v20
  %48 = vmatprep.subr.mxu0 0.0
  %49 = vmatpush1.msra.mxu0 %v34
  %50 = vmatprep.subr.mxu0 0.0
  %51 = vmatpush1.msra.mxu0 0.0
  %52 = vmatprep.subr.mxu0 0.0
  %53 = vmatpush1.msra.mxu0 0.0
  %54 = vmatprep.subr.mxu0 0.0
  %55 = vmatpush1.msra.mxu0 0.0
  %56 = vmatprep.subr.mxu0 0.0
  %57 = vmatpush1.msra.mxu0 0.0
  %58 = vmatprep.subr.mxu0 0.0
  %59 = vmatpush1.msra.mxu0 0.0
  %60 = vmatprep.subr.mxu0 0.0
  %61 = vmatpush1.msra.mxu0 0.0
  %62 = vmatprep.subr.mxu0 0.0
  %63 = vmatpush1.msra.mxu0 0.0
  %64 = vmatprep.subr.mxu0 0.0
  %65 = vmatpush1.msra.mxu0 0.0
  %66 = vmatprep.subr.mxu0 0.0
  %67 = vmatpush1.msra.mxu0 0.0
  %68 = vmatprep.subr.mxu0 0.0
  %69 = vmatpush1.msra.mxu0 0.0
  %70 = vmatprep.subr.mxu0 0.0
  %71 = vmatpush1.msra.mxu0 0.0
  %72 = vmatprep.subr.mxu0 0.0
  %73 = vmatpush1.msra.mxu0 0.0
  %74 = vmatprep.subr.mxu0 0.0
  %75 = vmatpush1.msra.mxu0 0.0
  %76 = vmatprep.subr.mxu0 0.0
  %77 = vmatpush1.msra.mxu0 0.0
  %78 = vmatprep.subr.mxu0 0.0
  %79 = vmatpush1.msra.mxu0 0.0
  %80 = vmatprep.subr.mxu0 0.0
  %81 = vmatpush1.msra.mxu0 0.0
  %82 = vmatprep.subr.mxu0 0.0
  %83 = vmatpush1.msra.mxu0 0.0
  %84 = vmatprep.subr.mxu0 0.0
  %85 = vmatpush1.msra.mxu0 0.0
  %86 = vmatprep.subr.mxu0 0.0
  %87 = vmatpush1.msra.mxu0 0.0
  %88 = vmatprep.subr.mxu0 0.0
  %89 = vmatpush1.msra.mxu0 0.0
  %90 = vmatprep.subr.mxu0 0.0
  %91 = vmatpush1.msra.mxu0 0.0
  %92 = vmatprep.subr.mxu0 0.0
  %93 = vmatpush1.msra.mxu0 0.0
  %94 = vmatprep.subr.mxu0 0.0
  %95 = vmatpush1.msra.mxu0 0.0
  %96 = vmatprep.subr.mxu0 0.0
  %97 = vmatpush1.msra.mxu0 0.0
  %98 = vmatprep.subr.mxu0 0.0
  %99 = vmatpush1.msra.mxu0 0.0
  %100 = vmatprep.mubr.f32.mxu0 0.0
  %101 = vmatmul.mubr.f32.gmra.mrb[0].mxu0 %v30
  %v102 = vpop.f32.mrb[0].mxu0
  %v103 = vadd.f32 %v26, %v102
  %v104 = vpop.f32.mrb[0].mxu0
  %105 = vdwg.mxu0
  %v106 = vtanh.pop %v103
  %vm107 = vcmask 521216
  %108 = vst.msk [vmem:[%s3] sm:$0x3f] %vm107, %v106
  // Predicated region
  $region14: #{conv_transpose_tanh.1} parent=0 // pred_check
    _
  $region15: #{conv_transpose_tanh.1} parent=0 // pred_check_branch
    %110 = sbr.rel (0) target = $region17
  $region16: #{conv_transpose_tanh.1} parent=0 // pred_region
    _
  $region17: #{conv_transpose_tanh.1} parent=0 // pred_fallthru
    _
  // Predicated region
  $region18: #{conv_transpose_tanh.1} parent=0 // pred_check
    _
  $region19: #{conv_transpose_tanh.1} parent=0 // pred_check_branch
    %112 = sbr.rel (0) target = $region21
  $region20: #{conv_transpose_tanh.1} parent=0 // pred_region
    _
  $region21: #{conv_transpose_tanh.1} parent=0 // pred_fallthru
    _

</llo_original>
